<compile_context>
chip_gen: v6e
topology: v6e:2x2x1
jax: 0.10.0
libtpu: 0.0.40
codegen_flags: <defaults>
</compile_context>

<pallas_src>
import jax
import jax.numpy as jnp
import numpy as np
from jax.experimental import pallas as pl
from jax.experimental.pallas import tpu as pltpu


def _round_up(x, m):
    return ((x + m - 1) // m) * m


# ----------------------------------------------------------------------------
# Fused 3-layer MLP kernel: one M-tile of relu(relu(x@W1+b1)@W2+b2)@W3+b3
# ----------------------------------------------------------------------------
def _fused_mlp_kernel(x_ref, w1_ref, b1_ref, w2_ref, b2_ref, w3_ref, b3_ref,
                      o_ref):
    # bf16 MXU inputs, f32 accumulation (native fast path on v5e/v6e/v7x).
    x = x_ref[...].astype(jnp.bfloat16)
    h = jnp.dot(x, w1_ref[...], preferred_element_type=jnp.float32)
    h = jnp.maximum(h + b1_ref[...], 0.0).astype(jnp.bfloat16)
    h = jnp.dot(h, w2_ref[...], preferred_element_type=jnp.float32)
    h = jnp.maximum(h + b2_ref[...], 0.0).astype(jnp.bfloat16)
    o = jnp.dot(h, w3_ref[...], preferred_element_type=jnp.float32)
    o_ref[...] = o + b3_ref[...]


# ----------------------------------------------------------------------------
# Wrapper: Discriminator.forward
# ----------------------------------------------------------------------------
def discriminator_forward(s_t, a_t, params, *, tm_max=256):
    """s_t: (T, B, belief_size), a_t: (T, B, state_size) float32.

    Returns {'loc': (T, B, output_size) float32, 'scale': 1.0}.
    """
    # TODO(synk): only the module's default activation='relu' is implemented.
    T, B = s_t.shape[:2]
    M = T * B
    x = jnp.concatenate(
        [s_t.reshape(M, -1), a_t.reshape(M, -1)], axis=1).astype(jnp.float32)
    K = x.shape[1]

    w1 = params["fc1_w"].astype(jnp.bfloat16)   # (K, H)
    w2 = params["fc2_w"].astype(jnp.bfloat16)   # (H, H)
    w3 = params["fc3_w"].astype(jnp.bfloat16)   # (H, O)
    b1 = params["fc1_b"].reshape(1, -1).astype(jnp.float32)
    b2 = params["fc2_b"].reshape(1, -1).astype(jnp.float32)
    b3 = params["fc3_b"].reshape(1, -1).astype(jnp.float32)
    H = w1.shape[1]
    O = w3.shape[1]

    # Row tile: shrink to the 8-aligned batch for small T*B (pads <= 7 rows);
    # tile at tm_max for big batches.  Weights are tiny, so VMEM is not a
    # constraint at these sizes on any generation.
    tm = min(tm_max, _round_up(M, 8))
    M_pad = _round_up(M, tm)
    if M_pad != M:
        x = jnp.pad(x, ((0, M_pad - M), (0, 0)))

    # Output last dim O may be < 128 lanes; it is a tiny (M, O) tensor so the
    # masked stores are negligible here.
    out = pl.pallas_call(
        _fused_mlp_kernel,
        out_shape=jax.ShapeDtypeStruct((M_pad, O), jnp.float32),
        grid=(M_pad // tm,),
        in_specs=[
            pl.BlockSpec((tm, K), lambda i: (i, 0)),   # x rows (tiled)
            pl.BlockSpec((K, H), lambda i: (0, 0)),    # W1 (resident)
            pl.BlockSpec((1, H), lambda i: (0, 0)),    # b1
            pl.BlockSpec((H, H), lambda i: (0, 0)),    # W2
            pl.BlockSpec((1, H), lambda i: (0, 0)),    # b2
            pl.BlockSpec((H, O), lambda i: (0, 0)),    # W3
            pl.BlockSpec((1, O), lambda i: (0, 0)),    # b3
        ],
        out_specs=pl.BlockSpec((tm, O), lambda i: (i, 0)),
        compiler_params=pltpu.CompilerParams(
            dimension_semantics=("parallel",)),
    )(x, w1, b1, w2, b2, w3, b3)

    loc = out[:M].reshape(T, B, O)
    return {"loc": loc, "scale": 1.0}


# ----------------------------------------------------------------------------
# Pure-JAX reference (direct transcription of the PyTorch forward, f32/HIGHEST)
# ----------------------------------------------------------------------------
def reference_forward(s_t, a_t, params):
    T, B = s_t.shape[:2]
    M = T * B
    x = jnp.concatenate([s_t.reshape(M, -1), a_t.reshape(M, -1)], axis=1)
    hp = jax.lax.Precision.HIGHEST
    h = jnp.maximum(
        jnp.dot(x, params["fc1_w"], precision=hp) + params["fc1_b"], 0.0)
    h = jnp.maximum(
        jnp.dot(h, params["fc2_w"], precision=hp) + params["fc2_b"], 0.0)
    o = jnp.dot(h, params["fc3_w"], precision=hp) + params["fc3_b"]
    return o.reshape(T, B, -1)


# ----------------------------------------------------------------------------
# Deterministic parameter init (nn.Linear-style, weights stored (in, out))
# ----------------------------------------------------------------------------
def init_params(key, belief_size, state_size, hidden_size, output_size):
    keys = jax.random.split(key, 6)

    def linear(kw, kb, fan_in, fan_out):
        bound = 1.0 / np.sqrt(fan_in)
        w = jax.random.uniform(kw, (fan_in, fan_out), jnp.float32,
                               -bound, bound)
        b = jax.random.uniform(kb, (fan_out,), jnp.float32, -bound, bound)
        return w, b

    p = {}
    p["fc1_w"], p["fc1_b"] = linear(keys[0], keys[1],
                                    belief_size + state_size, hidden_size)
    p["fc2_w"], p["fc2_b"] = linear(keys[2], keys[3], hidden_size, hidden_size)
    p["fc3_w"], p["fc3_b"] = linear(keys[4], keys[5], hidden_size, output_size)
    return p


# ----------------------------------------------------------------------------
if __name__ == "__main__":
    belief_size, state_size, hidden_size, output_size = 32, 16, 64, 10
    T, B = 8, 4

    key = jax.random.PRNGKey(0)
    k_s, k_a, k_p = jax.random.split(key, 3)
    s_t = jax.random.normal(k_s, (T, B, belief_size), jnp.float32)
    a_t = jax.random.normal(k_a, (T, B, state_size), jnp.float32)
    params = init_params(k_p, belief_size, state_size, hidden_size,
                         output_size)

    out = discriminator_forward(s_t, a_t, params)
    loc = jax.block_until_ready(out["loc"])
    assert loc.shape == (T, B, output_size), loc.shape
    assert out["scale"] == 1.0

    ref = jax.block_until_ready(reference_forward(s_t, a_t, params))
    # Tolerance accounts for bf16 MXU inputs (per perf review) vs. the f32
    # HIGHEST-precision reference.
    np.testing.assert_allclose(np.asarray(loc), np.asarray(ref),
                               rtol=2e-2, atol=2e-2)

    print("KERNEL_OK")
</pallas_src>

<mosaic_0001>
module attributes {stable_mosaic.version = 11 : i64} {
  func.func @_fused_mlp_kernel(%arg0: i32, %arg1: memref<32x48xf32, #tpu.memory_space<vmem>>, %arg2: memref<48x64xbf16, #tpu.memory_space<vmem>>, %arg3: memref<1x64xf32, #tpu.memory_space<vmem>>, %arg4: memref<64x64xbf16, #tpu.memory_space<vmem>>, %arg5: memref<1x64xf32, #tpu.memory_space<vmem>>, %arg6: memref<64x10xbf16, #tpu.memory_space<vmem>>, %arg7: memref<1x10xf32, #tpu.memory_space<vmem>>, %arg8: memref<32x10xf32, #tpu.memory_space<vmem>>) attributes {dimension_semantics = [#tpu.dimension_semantics<parallel>], iteration_bounds = array<i64: 1>, scalar_prefetch = 0 : i64, scratch_operands = 0 : i64, tpu.core_type = #tpu.core_type<tc>, window_params = [{transform_indices = @transform_0, window_bounds = array<i64: 32, 48>}, {pipeline_mode = #tpu.pipeline_mode<synchronous>, transform_indices = @transform_1, window_bounds = array<i64: 48, 64>}, {pipeline_mode = #tpu.pipeline_mode<synchronous>, transform_indices = @transform_2, window_bounds = array<i64: 1, 64>}, {pipeline_mode = #tpu.pipeline_mode<synchronous>, transform_indices = @transform_3, window_bounds = array<i64: 64, 64>}, {pipeline_mode = #tpu.pipeline_mode<synchronous>, transform_indices = @transform_4, window_bounds = array<i64: 1, 64>}, {pipeline_mode = #tpu.pipeline_mode<synchronous>, transform_indices = @transform_5, window_bounds = array<i64: 64, 10>}, {pipeline_mode = #tpu.pipeline_mode<synchronous>, transform_indices = @transform_6, window_bounds = array<i64: 1, 10>}, {transform_indices = @transform_7, window_bounds = array<i64: 32, 10>}]} {
    %c0 = arith.constant 0 : index
    %c0_0 = arith.constant 0 : index
    %0 = vector.load %arg1[%c0, %c0_0] : memref<32x48xf32, #tpu.memory_space<vmem>>, vector<32x48xf32>
    %1 = arith.truncf %0 : vector<32x48xf32> to vector<32x48xbf16>
    %c0_1 = arith.constant 0 : index
    %c0_2 = arith.constant 0 : index
    %2 = vector.load %arg2[%c0_1, %c0_2] : memref<48x64xbf16, #tpu.memory_space<vmem>>, vector<48x64xbf16>
    %cst = arith.constant dense<0.000000e+00> : vector<32x64xf32>
    %3 = tpu.matmul %1, %2, %cst {dimension_numbers = #tpu.dot_dimension_numbers<[1], [0], [0], [1], [0, 0, 1, 1], [], []>} : vector<32x48xbf16>, vector<48x64xbf16>, vector<32x64xf32> -> vector<32x64xf32>
    %c0_3 = arith.constant 0 : index
    %c0_4 = arith.constant 0 : index
    %4 = vector.load %arg3[%c0_3, %c0_4] : memref<1x64xf32, #tpu.memory_space<vmem>>, vector<1x64xf32>
    %5 = vector.broadcast %4 : vector<1x64xf32> to vector<32x64xf32>
    %6 = arith.addf %3, %5 : vector<32x64xf32>
    %cst_5 = arith.constant 0.000000e+00 : f32
    %7 = vector.broadcast %cst_5 : f32 to vector<32x64xf32>
    %8 = arith.maximumf %6, %7 : vector<32x64xf32>
    %9 = arith.truncf %8 : vector<32x64xf32> to vector<32x64xbf16>
    %c0_6 = arith.constant 0 : index
    %c0_7 = arith.constant 0 : index
    %10 = vector.load %arg4[%c0_6, %c0_7] : memref<64x64xbf16, #tpu.memory_space<vmem>>, vector<64x64xbf16>
    %cst_8 = arith.constant dense<0.000000e+00> : vector<32x64xf32>
    %11 = tpu.matmul %9, %10, %cst_8 {dimension_numbers = #tpu.dot_dimension_numbers<[1], [0], [0], [1], [0, 0, 1, 1], [], []>} : vector<32x64xbf16>, vector<64x64xbf16>, vector<32x64xf32> -> vector<32x64xf32>
    %c0_9 = arith.constant 0 : index
    %c0_10 = arith.constant 0 : index
    %12 = vector.load %arg5[%c0_9, %c0_10] : memref<1x64xf32, #tpu.memory_space<vmem>>, vector<1x64xf32>
    %13 = vector.broadcast %12 : vector<1x64xf32> to vector<32x64xf32>
    %14 = arith.addf %11, %13 : vector<32x64xf32>
    %cst_11 = arith.constant 0.000000e+00 : f32
    %15 = vector.broadcast %cst_11 : f32 to vector<32x64xf32>
    %16 = arith.maximumf %14, %15 : vector<32x64xf32>
    %17 = arith.truncf %16 : vector<32x64xf32> to vector<32x64xbf16>
    %c0_12 = arith.constant 0 : index
    %c0_13 = arith.constant 0 : index
    %18 = vector.load %arg6[%c0_12, %c0_13] : memref<64x10xbf16, #tpu.memory_space<vmem>>, vector<64x10xbf16>
    %cst_14 = arith.constant dense<0.000000e+00> : vector<32x10xf32>
    %19 = tpu.matmul %17, %18, %cst_14 {dimension_numbers = #tpu.dot_dimension_numbers<[1], [0], [0], [1], [0, 0, 1, 1], [], []>} : vector<32x64xbf16>, vector<64x10xbf16>, vector<32x10xf32> -> vector<32x10xf32>
    %c0_15 = arith.constant 0 : index
    %c0_16 = arith.constant 0 : index
    %20 = vector.load %arg7[%c0_15, %c0_16] : memref<1x10xf32, #tpu.memory_space<vmem>>, vector<1x10xf32>
    %21 = vector.broadcast %20 : vector<1x10xf32> to vector<32x10xf32>
    %22 = arith.addf %19, %21 : vector<32x10xf32>
    %c0_17 = arith.constant 0 : index
    %c0_18 = arith.constant 0 : index
    %23 = vector.load %arg8[%c0_17, %c0_18] : memref<32x10xf32, #tpu.memory_space<vmem>>, vector<32x10xf32>
    tpu.vector_store %arg8[%c0_17, %c0_18], %22 {strides = array<i32>} : memref<32x10xf32, #tpu.memory_space<vmem>>, vector<32x10xf32>,
    return
  }
  func.func @transform_0(%arg0: i32) -> (i32, i32) {
    %c0_i32 = arith.constant 0 : i32
    %c0_i32_0 = arith.constant 0 : i32
    return %arg0, %c0_i32 : i32, i32
  }
  func.func @transform_1(%arg0: i32) -> (i32, i32) {
    %c0_i32 = arith.constant 0 : i32
    %c0_i32_0 = arith.constant 0 : i32
    %c0_i32_1 = arith.constant 0 : i32
    return %c0_i32, %c0_i32_0 : i32, i32
  }
  func.func @transform_2(%arg0: i32) -> (i32, i32) {
    %c0_i32 = arith.constant 0 : i32
    %c0_i32_0 = arith.constant 0 : i32
    %c0_i32_1 = arith.constant 0 : i32
    return %c0_i32, %c0_i32_0 : i32, i32
  }
  func.func @transform_3(%arg0: i32) -> (i32, i32) {
    %c0_i32 = arith.constant 0 : i32
    %c0_i32_0 = arith.constant 0 : i32
    %c0_i32_1 = arith.constant 0 : i32
    return %c0_i32, %c0_i32_0 : i32, i32
  }
  func.func @transform_4(%arg0: i32) -> (i32, i32) {
    %c0_i32 = arith.constant 0 : i32
    %c0_i32_0 = arith.constant 0 : i32
    %c0_i32_1 = arith.constant 0 : i32
    return %c0_i32, %c0_i32_0 : i32, i32
  }
  func.func @transform_5(%arg0: i32) -> (i32, i32) {
    %c0_i32 = arith.constant 0 : i32
    %c0_i32_0 = arith.constant 0 : i32
    %c0_i32_1 = arith.constant 0 : i32
    return %c0_i32, %c0_i32_0 : i32, i32
  }
  func.func @transform_6(%arg0: i32) -> (i32, i32) {
    %c0_i32 = arith.constant 0 : i32
    %c0_i32_0 = arith.constant 0 : i32
    %c0_i32_1 = arith.constant 0 : i32
    return %c0_i32, %c0_i32_0 : i32, i32
  }
  func.func @transform_7(%arg0: i32) -> (i32, i32) {
    %c0_i32 = arith.constant 0 : i32
    %c0_i32_0 = arith.constant 0 : i32
    return %arg0, %c0_i32 : i32, i32
  }
}

</mosaic_0001>

<llo_original>
// kernel: tpu_custom_call.1
$region0: #{tpu_custom_call.1}
  #allocation0 [shape = 'u32[]', space=smem, size = 0x4, offset = 0x4, fixed_abs, tag = 'smem constant byte address 0x4 - core index']
  #allocation1 [shape = 'u32[144,128]{1,0:T(1,128)}', space=vmem, size = 0x12000, scoped, tag = 'internal scratch']
  %s0 = inlined_call_operand.vmem [shape: f32[32,48], index: 0, kind: input, shape index: {}]
  %s1 = inlined_call_operand.hbm [shape: bf16[48,64], index: 1, kind: input, shape index: {}]
  %s2 = inlined_call_operand.vmem [shape: f32[1,64], index: 2, kind: input, shape index: {}]
  %s3 = inlined_call_operand.hbm [shape: bf16[64,64], index: 3, kind: input, shape index: {}]
  %s4 = inlined_call_operand.vmem [shape: f32[1,64], index: 4, kind: input, shape index: {}]
  %s5 = inlined_call_operand.vmem [shape: bf16[64,10], index: 5, kind: input, shape index: {}]
  %s6 = inlined_call_operand.vmem [shape: f32[1,10], index: 6, kind: input, shape index: {}]
  %s7 = inlined_call_operand.vmem [shape: f32[32,10], index: 7, kind: output, shape index: {}]
  %s8 = sld [smem:[#allocation0]]
  $region46: #{tpu_custom_call.1} parent=0
    _
  %s10 = ssub.s32 1, %s8
  %s11 = scalar_select 0, %s10, %s8
  $region1: #{tpu_custom_call.1} parent=0
    #allocation2 [shape = 'u8[12288]{0}', space=vmem, size = 0x3000, scoped, tag = 'input window, operand 1, single buffered']
    #allocation3 [shape = 's32[1]{0}', space=sflag, size = 0x4, scoped, tag = 'scoped memory for tpu_custom_call.1']
    #allocation4 [shape = 'u8[16384]{0}', space=vmem, size = 0x4000, scoped, tag = 'input window, operand 3, single buffered']
    #allocation5 [shape = 's32[1]{0}', space=sflag, size = 0x4, scoped, tag = 'scoped memory for tpu_custom_call.1']
    %12 = vsyncpa [#allocation3], 0
    %13 = vsyncpa [#allocation5], 0
    // Predicated region
    $region2: #{tpu_custom_call.1} parent=1 // pred_check
      _
    $region3: #{tpu_custom_call.1} parent=1 // pred_check_branch
      %15 = sbr.rel (0) target = $region5
    $region4: #{tpu_custom_call.1} parent=1 // pred_region
      _
    $region5: #{tpu_custom_call.1} parent=1 // pred_fallthru
      _
    // Predicated region
    $region6: #{tpu_custom_call.1} parent=1 // pred_check
      _
    $region7: #{tpu_custom_call.1} parent=1 // pred_check_branch
      %17 = sbr.rel (0) target = $region9
    $region8: #{tpu_custom_call.1} parent=1 // pred_region
      %s19 = ssub.s32 384, 384
      %20 = vsyncadd [#allocation3], %s19
      %s21 = sshll.u32 [#allocation2], 4
      %s22 = int_to_ptr.vmem [resolvable:$true] %s21
      %27 = dma.hbm_to_vmem [thread:$0]  %s1, 384, %s22, [#allocation3], 64, 64, 4
    $region9: #{tpu_custom_call.1} parent=1 // pred_fallthru
      _
    // Predicated region
    $region10: #{tpu_custom_call.1} parent=1 // pred_check
      _
    $region11: #{tpu_custom_call.1} parent=1 // pred_check_branch
      %29 = sbr.rel (0) target = $region13
    $region12: #{tpu_custom_call.1} parent=1 // pred_region
      _
    $region13: #{tpu_custom_call.1} parent=1 // pred_fallthru
      _
    // Predicated region
    $region14: #{tpu_custom_call.1} parent=1 // pred_check
      _
    $region15: #{tpu_custom_call.1} parent=1 // pred_check_branch
      %31 = sbr.rel (0) target = $region17
    $region16: #{tpu_custom_call.1} parent=1 // pred_region
      %s33 = ssub.s32 512, 512
      %34 = vsyncadd [#allocation5], %s33
      %s35 = sshll.u32 [#allocation4], 4
      %s36 = int_to_ptr.vmem [resolvable:$true] %s35
      %41 = dma.hbm_to_vmem [thread:$0]  %s3, 512, %s36, [#allocation5], 64, 64, 4
    $region17: #{tpu_custom_call.1} parent=1 // pred_fallthru
      _
    // Predicated region
    $region18: #{tpu_custom_call.1} parent=1 // pred_check
      _
    $region19: #{tpu_custom_call.1} parent=1 // pred_check_branch
      %43 = sbr.rel (0) target = $region21
    $region20: #{tpu_custom_call.1} parent=1 // pred_region
      _
    $region21: #{tpu_custom_call.1} parent=1 // pred_fallthru
      _
    // Predicated region
    $region22: #{tpu_custom_call.1} parent=1 // pred_check
      _
    $region23: #{tpu_custom_call.1} parent=1 // pred_check_branch
      %45 = sbr.rel (0) target = $region25
    $region24: #{tpu_custom_call.1} parent=1 // pred_region
      _
    $region25: #{tpu_custom_call.1} parent=1 // pred_fallthru
      _
    // Predicated region
    $region26: #{tpu_custom_call.1} parent=1 // pred_check
      _
    $region27: #{tpu_custom_call.1} parent=1 // pred_check_branch
      %47 = sbr.rel (0) target = $region29
    $region28: #{tpu_custom_call.1} parent=1 // pred_region
      _
    $region29: #{tpu_custom_call.1} parent=1 // pred_fallthru
      _
    // Predicated region
    $region30: #{tpu_custom_call.1} parent=1 // pred_check
      _
    $region31: #{tpu_custom_call.1} parent=1 // pred_check_branch
      %49 = sbr.rel (0) target = $region33
    $region32: #{tpu_custom_call.1} parent=1 // pred_region
      %50 = dma.done [#allocation3], 384
    $region33: #{tpu_custom_call.1} parent=1 // pred_fallthru
      _
    // Predicated region
    $region34: #{tpu_custom_call.1} parent=1 // pred_check
      _
    $region35: #{tpu_custom_call.1} parent=1 // pred_check_branch
      %52 = sbr.rel (0) target = $region37
    $region36: #{tpu_custom_call.1} parent=1 // pred_region
      %53 = dma.done [#allocation5], 512
    $region37: #{tpu_custom_call.1} parent=1 // pred_fallthru
      _
    %v55 = vld [vmem:[%s0] sm:$0xff]
    %v56 = vld [vmem:[%s0 + $0x8] sm:$0xff]
    %v57 = vld [vmem:[%s0 + $0x10] sm:$0xff]
    %v58 = vld [vmem:[%s0 + $0x18] sm:$0xff]
    %v59 = vpack.c.bf16 %v56, %v55
    %v60 = vpack.c.bf16 %v58, %v57
    %v61 = vld [vmem:[#allocation2] sm:$0xf]
    %v62 = vld [vmem:[#allocation2 + $0x4] sm:$0xf]
    %v63 = vld [vmem:[#allocation2 + $0x8] sm:$0xf]
    %v64 = vld [vmem:[#allocation2 + $0xc] sm:$0xf]
    %v65 = vld [vmem:[#allocation2 + $0x10] sm:$0xf]
    %v66 = vld [vmem:[#allocation2 + $0x14] sm:$0xf]
    %v67 = vld [vmem:[%s2] sm:$0x1]
    %v69 = vlaneseq
    %v70 = vshrl.u32 %v69, 7
    %v71 = vsub.s32 0, %v70
    %v72 = vrot.slane %v67, %v71
    %v80 = vunpack.c.l.b16 %v61
    %v81 = vunpack.c.l.b16 %v62
    %v82 = vunpack.c.l.b16 %v63
    %v83 = vunpack.c.l.b16 %v64
    %v84 = vunpack.c.l.b16 %v65
    %v85 = vunpack.c.l.b16 %v66
    %v86 = vpack.c.b16 %v81, %v80
    %v87 = vpack.c.b16 %v83, %v82
    %v88 = vpack.c.b16 %v85, %v84
    %vm92 = vcmask 392192
    %v94 = vsel %vm92, %v59, 0
    %v97 = vsel %vm92, %v60, 0
    %99 = vmatprep.subr.bf16.mxu0 0
    %100 = vmatpush1.bf16.msra.mxu0 0
    %101 = vmatprep.subr.bf16.mxu0 0
    %102 = vmatpush1.bf16.msra.mxu0 0
    %103 = vmatprep.subr.bf16.mxu0 0
    %104 = vmatpush1.bf16.msra.mxu0 0
    %105 = vmatprep.subr.bf16.mxu0 0
    %106 = vmatpush1.bf16.msra.mxu0 0
    %107 = vmatprep.subr.bf16.mxu0 0
    %108 = vmatpush1.bf16.msra.mxu0 0
    %109 = vmatprep.subr.bf16.mxu0 0
    %110 = vmatpush1.bf16.msra.mxu0 %v88
    %111 = vmatprep.subr.bf16.mxu0 0
    %112 = vmatpush1.bf16.msra.mxu0 %v87
    %113 = vmatprep.subr.bf16.mxu0 0
    %114 = vmatpush1.bf16.msra.mxu0 %v86
    %115 = vmatprep.subr.bf16.mxu0 0
    %116 = vmatpush2.bf16.msra.mxu0 0
    %117 = vmatprep.subr.bf16.mxu0 0
    %118 = vmatpush2.bf16.msra.mxu0 0
    %119 = vmatprep.subr.bf16.mxu0 0
    %120 = vmatpush2.bf16.msra.mxu0 0
    %121 = vmatprep.subr.bf16.mxu0 0
    %122 = vmatpush2.bf16.msra.mxu0 0
    %123 = vmatprep.subr.bf16.mxu0 0
    %124 = vmatpush2.bf16.msra.mxu0 0
    %125 = vmatprep.subr.bf16.mxu0 0
    %126 = vmatpush2.bf16.msra.mxu0 0
    %127 = vmatprep.subr.bf16.mxu0 0
    %128 = vmatpush2.bf16.msra.mxu0 0
    %129 = vmatprep.subr.bf16.mxu0 0
    %130 = vmatpush2.bf16.msra.mxu0 0
    %131 = vmatprep.mubr.bf16.mxu0 0
    %132 = vmatmul.mubr.bf16.gmra.mxu0 %v94
    %v133 = vpop.f32.mrf.mxu0
    %v134 = vadd.f32 %v72, %v133
    %v135 = vpop.f32.mrf.mxu0
    %v136 = vpop.f32.mrf.mxu0
    %v137 = vadd.f32 %v72, %v136
    %v138 = vpop.f32.mrf.mxu0
    %139 = vmatprep.mubr.bf16.mxu0 0
    %140 = vmatmul.mubr.bf16.gmra.mxu0 %v97
    %v141 = vpop.f32.mrf.mxu0
    %v142 = vadd.f32 %v72, %v141
    %v143 = vpop.f32.mrf.mxu0
    %v144 = vpop.f32.mrf.mxu0
    %v145 = vadd.f32 %v72, %v144
    %v146 = vpop.f32.mrf.mxu0
    %147 = vdwg.mxu0
    %v148 = vmax.f32 %v134, 0.0
    %v149 = vmax.f32 %v137, 0.0
    %v150 = vmax.f32 %v142, 0.0
    %v151 = vmax.f32 %v145, 0.0
    %v152 = vpack.c.bf16 %v149, %v148
    %v153 = vpack.c.bf16 %v151, %v150
    %v154 = vld [vmem:[#allocation4] sm:$0xf]
    %v155 = vld [vmem:[#allocation4 + $0x4] sm:$0xf]
    %v156 = vld [vmem:[#allocation4 + $0x8] sm:$0xf]
    %v157 = vld [vmem:[#allocation4 + $0xc] sm:$0xf]
    %v158 = vld [vmem:[#allocation4 + $0x10] sm:$0xf]
    %v159 = vld [vmem:[#allocation4 + $0x14] sm:$0xf]
    %v160 = vld [vmem:[#allocation4 + $0x18] sm:$0xf]
    %v161 = vld [vmem:[#allocation4 + $0x1c] sm:$0xf]
    %v162 = vld [vmem:[%s4] sm:$0x1]
    %v164 = vlaneseq
    %v165 = vshrl.u32 %v164, 7
    %v166 = vsub.s32 0, %v165
    %v167 = vrot.slane %v162, %v166
    %v177 = vunpack.c.l.b16 %v154
    %v178 = vunpack.c.l.b16 %v155
    %v179 = vunpack.c.l.b16 %v156
    %v180 = vunpack.c.l.b16 %v157
    %v181 = vunpack.c.l.b16 %v158
    %v182 = vunpack.c.l.b16 %v159
    %v183 = vunpack.c.l.b16 %v160
    %v184 = vunpack.c.l.b16 %v161
    %v185 = vpack.c.b16 %v178, %v177
    %v186 = vpack.c.b16 %v180, %v179
    %v187 = vpack.c.b16 %v182, %v181
    %v188 = vpack.c.b16 %v184, %v183
    %vm193 = vcmask 523264
    %v195 = vsel %vm193, %v152, 0
    %v198 = vsel %vm193, %v153, 0
    %200 = vmatprep.subr.bf16.mxu0 0
    %201 = vmatpush1.bf16.msra.mxu0 0
    %202 = vmatprep.subr.bf16.mxu0 0
    %203 = vmatpush1.bf16.msra.mxu0 0
    %204 = vmatprep.subr.bf16.mxu0 0
    %205 = vmatpush1.bf16.msra.mxu0 0
    %206 = vmatprep.subr.bf16.mxu0 0
    %207 = vmatpush1.bf16.msra.mxu0 0
    %208 = vmatprep.subr.bf16.mxu0 0
    %209 = vmatpush1.bf16.msra.mxu0 %v188
    %210 = vmatprep.subr.bf16.mxu0 0
    %211 = vmatpush1.bf16.msra.mxu0 %v187
    %212 = vmatprep.subr.bf16.mxu0 0
    %213 = vmatpush1.bf16.msra.mxu0 %v186
    %214 = vmatprep.subr.bf16.mxu0 0
    %215 = vmatpush1.bf16.msra.mxu0 %v185
    %216 = vmatprep.subr.bf16.mxu0 0
    %217 = vmatpush2.bf16.msra.mxu0 0
    %218 = vmatprep.subr.bf16.mxu0 0
    %219 = vmatpush2.bf16.msra.mxu0 0
    %220 = vmatprep.subr.bf16.mxu0 0
    %221 = vmatpush2.bf16.msra.mxu0 0
    %222 = vmatprep.subr.bf16.mxu0 0
    %223 = vmatpush2.bf16.msra.mxu0 0
    %224 = vmatprep.subr.bf16.mxu0 0
    %225 = vmatpush2.bf16.msra.mxu0 0
    %226 = vmatprep.subr.bf16.mxu0 0
    %227 = vmatpush2.bf16.msra.mxu0 0
    %228 = vmatprep.subr.bf16.mxu0 0
    %229 = vmatpush2.bf16.msra.mxu0 0
    %230 = vmatprep.subr.bf16.mxu0 0
    %231 = vmatpush2.bf16.msra.mxu0 0
    %232 = vmatprep.mubr.bf16.mxu0 0
    %233 = vmatmul.mubr.bf16.gmra.mxu0 %v195
    %v234 = vpop.f32.mrf.mxu0
    %v235 = vadd.f32 %v167, %v234
    %v236 = vpop.f32.mrf.mxu0
    %v237 = vpop.f32.mrf.mxu0
    %v238 = vadd.f32 %v167, %v237
    %v239 = vpop.f32.mrf.mxu0
    %240 = vmatprep.mubr.bf16.mxu0 0
    %241 = vmatmul.mubr.bf16.gmra.mxu0 %v198
    %v242 = vpop.f32.mrf.mxu0
    %v243 = vadd.f32 %v167, %v242
    %v244 = vpop.f32.mrf.mxu0
    %v245 = vpop.f32.mrf.mxu0
    %v246 = vadd.f32 %v167, %v245
    %v247 = vpop.f32.mrf.mxu0
    %248 = vdwg.mxu0
    %v249 = vmax.f32 %v235, 0.0
    %v250 = vmax.f32 %v238, 0.0
    %v251 = vmax.f32 %v243, 0.0
    %v252 = vmax.f32 %v246, 0.0
    %v253 = vpack.c.bf16 %v250, %v249
    %v254 = vpack.c.bf16 %v252, %v251
    %v255 = vld [vmem:[%s5] sm:$0xf]
    %v256 = vld [vmem:[%s5 + $0x4] sm:$0xf]
    %v257 = vld [vmem:[%s5 + $0x8] sm:$0xf]
    %v258 = vld [vmem:[%s5 + $0xc] sm:$0xf]
    %v259 = vld [vmem:[%s5 + $0x10] sm:$0xf]
    %v260 = vld [vmem:[%s5 + $0x14] sm:$0xf]
    %v261 = vld [vmem:[%s5 + $0x18] sm:$0xf]
    %v262 = vld [vmem:[%s5 + $0x1c] sm:$0xf]
    %v263 = vld [vmem:[%s6] sm:$0x1]
    %v265 = vlaneseq
    %v266 = vshrl.u32 %v265, 7
    %v267 = vsub.s32 0, %v266
    %v268 = vrot.slane %v263, %v267
    %v278 = vunpack.c.l.b16 %v255
    %v279 = vunpack.c.l.b16 %v256
    %v280 = vunpack.c.l.b16 %v257
    %v281 = vunpack.c.l.b16 %v258
    %v282 = vunpack.c.l.b16 %v259
    %v283 = vunpack.c.l.b16 %v260
    %v284 = vunpack.c.l.b16 %v261
    %v285 = vunpack.c.l.b16 %v262
    %v286 = vpack.c.b16 %v279, %v278
    %v287 = vpack.c.b16 %v281, %v280
    %v288 = vpack.c.b16 %v283, %v282
    %v289 = vpack.c.b16 %v285, %v284
    %v295 = vsel %vm193, %v253, 0
    %v298 = vsel %vm193, %v254, 0
    %300 = vmatprep.subr.bf16.mxu0 0
    %301 = vmatpush1.bf16.msra.mxu0 0
    %302 = vmatprep.subr.bf16.mxu0 0
    %303 = vmatpush1.bf16.msra.mxu0 0
    %304 = vmatprep.subr.bf16.mxu0 0
    %305 = vmatpush1.bf16.msra.mxu0 0
    %306 = vmatprep.subr.bf16.mxu0 0
    %307 = vmatpush1.bf16.msra.mxu0 0
    %308 = vmatprep.subr.bf16.mxu0 0
    %309 = vmatpush1.bf16.msra.mxu0 %v289
    %310 = vmatprep.subr.bf16.mxu0 0
    %311 = vmatpush1.bf16.msra.mxu0 %v288
    %312 = vmatprep.subr.bf16.mxu0 0
    %313 = vmatpush1.bf16.msra.mxu0 %v287
    %314 = vmatprep.subr.bf16.mxu0 0
    %315 = vmatpush1.bf16.msra.mxu0 %v286
    %316 = vmatprep.subr.bf16.mxu0 0
    %317 = vmatpush2.bf16.msra.mxu0 0
    %318 = vmatprep.subr.bf16.mxu0 0
    %319 = vmatpush2.bf16.msra.mxu0 0
    %320 = vmatprep.subr.bf16.mxu0 0
    %321 = vmatpush2.bf16.msra.mxu0 0
    %322 = vmatprep.subr.bf16.mxu0 0
    %323 = vmatpush2.bf16.msra.mxu0 0
    %324 = vmatprep.subr.bf16.mxu0 0
    %325 = vmatpush2.bf16.msra.mxu0 0
    %326 = vmatprep.subr.bf16.mxu0 0
    %327 = vmatpush2.bf16.msra.mxu0 0
    %328 = vmatprep.subr.bf16.mxu0 0
    %329 = vmatpush2.bf16.msra.mxu0 0
    %330 = vmatprep.subr.bf16.mxu0 0
    %331 = vmatpush2.bf16.msra.mxu0 0
    %332 = vmatprep.mubr.bf16.mxu0 0
    %333 = vmatmul.mubr.bf16.gmra.mxu0 %v295
    %v334 = vpop.f32.mrf.mxu0
    %v335 = vadd.f32 %v268, %v334
    %v336 = vpop.f32.mrf.mxu0
    %v337 = vpop.f32.mrf.mxu0
    %v338 = vadd.f32 %v268, %v337
    %v339 = vpop.f32.mrf.mxu0
    %340 = vmatprep.mubr.bf16.mxu0 0
    %341 = vmatmul.mubr.bf16.gmra.mxu0 %v298
    %v342 = vpop.f32.mrf.mxu0
    %v343 = vadd.f32 %v268, %v342
    %v344 = vpop.f32.mrf.mxu0
    %v345 = vpop.f32.mrf.mxu0
    %v346 = vadd.f32 %v268, %v345
    %v347 = vpop.f32.mrf.mxu0
    %348 = vdwg.mxu0
    %vm349 = vcmask 80896
    %350 = vst.msk [vmem:[%s7] sm:$0xff] %vm349, %v335
    %351 = vst.msk [vmem:[%s7 + $0x8] sm:$0xff] %vm349, %v338
    %352 = vst.msk [vmem:[%s7 + $0x10] sm:$0xff] %vm349, %v343
    %353 = vst.msk [vmem:[%s7 + $0x18] sm:$0xff] %vm349, %v346
    // Predicated region
    $region38: #{tpu_custom_call.1} parent=1 // pred_check
      _
    $region39: #{tpu_custom_call.1} parent=1 // pred_check_branch
      %355 = sbr.rel (0) target = $region41
    $region40: #{tpu_custom_call.1} parent=1 // pred_region
      _
    $region41: #{tpu_custom_call.1} parent=1 // pred_fallthru
      _
    // Predicated region
    $region42: #{tpu_custom_call.1} parent=1 // pred_check
      _
    $region43: #{tpu_custom_call.1} parent=1 // pred_check_branch
      %357 = sbr.rel (0) target = $region45
    $region44: #{tpu_custom_call.1} parent=1 // pred_region
      _
    $region45: #{tpu_custom_call.1} parent=1 // pred_fallthru
      _
    %358 = vsyncpa [#allocation3], 1
    %359 = vsyncpa [#allocation5], 1

</llo_original>
